<compile_context>
chip_gen: v7x
topology: tpu7x:2x2x1
jax: 0.10.0
libtpu: 0.0.40
codegen_flags: <defaults>
</compile_context>

<pallas_src>
import functools

import jax
import jax.numpy as jnp
from jax import lax
from jax.experimental import pallas as pl
from jax.experimental.pallas import tpu as pltpu


# --------------------------------------------------------------------------- #
# Kernel 1: scaled block mask for all N samples (single grid step)
# --------------------------------------------------------------------------- #
def _mask_kernel(rand_ref, bm_ref, *, gamma, block_size, N, H, W):
    """rand_ref: (N, H, W) f32 uniform[0,1);
    bm_ref: (N, H, W) block mask with numel/sum scale already folded in."""
    half = block_size // 2

    r = rand_ref[...]                                      # (N, H, W)
    seed = (r < gamma).astype(jnp.float32)                 # Bernoulli seed mask

    # Base mask: keep only the interior (zero a `half`-wide border).
    row = lax.broadcasted_iota(jnp.int32, (N, H, W), 1)
    col = lax.broadcasted_iota(jnp.int32, (N, H, W), 2)
    interior = ((row >= half) & (row < H - half) &
                (col >= half) & (col < W - half))
    seed = jnp.where(interior, seed, 0.0)

    # Separable stride-1 sum-pool via two batched MXU matmuls against banded
    # 0/1 matrices.  Output (i, j) covers input rows [i-half, i-half+bs-1] and
    # cols [j-half, j-half+bs-1], which folds in the even-block-size
    # right/bottom trim of the PyTorch module.  Counts are small integers in
    # f32, so max-pool == (count > 0) exactly.
    ii = lax.broadcasted_iota(jnp.int32, (N, H, H), 1)     # output row i
    rr = lax.broadcasted_iota(jnp.int32, (N, H, H), 2)     # input  row r
    bh = ((rr >= ii - half) &
          (rr <= ii + (block_size - 1 - half))).astype(jnp.float32)   # (N,H,H)
    cc = lax.broadcasted_iota(jnp.int32, (N, W, W), 1)     # input  col c
    jj = lax.broadcasted_iota(jnp.int32, (N, W, W), 2)     # output col j
    bwt = ((cc >= jj - half) &
           (cc <= jj + (block_size - 1 - half))).astype(jnp.float32)  # (N,W,W)

    t = jnp.einsum('nrc,ncj->nrj', seed, bwt,
                   preferred_element_type=jnp.float32)     # col-direction sums
    cnt = jnp.einsum('nir,nrj->nij', bh, t,
                     preferred_element_type=jnp.float32)   # row-direction sums

    bm = jnp.where(cnt > 0.5, 0.0, 1.0)                    # block mask (0/1)

    # Fold numel/sum renormalization directly into the mask.  The whole batch
    # is processed in this one grid step, so the global sum is available here.
    # Guard the degenerate all-dropped case (reference would produce NaN/inf).
    numel = jnp.float32(N * H * W)
    scale = numel / jnp.maximum(jnp.sum(bm), jnp.float32(1.0))
    bm_ref[...] = (bm * scale).astype(bm_ref.dtype)


# --------------------------------------------------------------------------- #
# Kernel 2: apply (scale already folded into the mask)
# --------------------------------------------------------------------------- #
def _apply_kernel(x_ref, bm_ref, out_ref):
    """out = x * scaled_block_mask; x_ref/out_ref: (1, Ct, H*W), bm_ref: (1, 1, H*W)."""
    out_ref[...] = (x_ref[...] * bm_ref[...]).astype(out_ref.dtype)


def _pick_channel_tile(C, HW, itemsize, budget_bytes=2 << 20):
    """Largest legal channel tile whose x-tile stays under `budget_bytes`
    (keeps double-buffered tiles well inside v7x's 64 MiB VMEM while
    amortizing per-step overhead).  Prefers an exact multiple-of-8 divisor of
    C; otherwise falls back to a multiple-of-8 tile with a padded edge block."""
    if C * HW * itemsize <= budget_bytes:
        return C
    best = 0
    ct = 8
    while ct <= C and ct * HW * itemsize <= budget_bytes:
        if C % ct == 0:
            best = ct
        ct += 8
    if best > 0:
        return best
    ct = (budget_bytes // (HW * itemsize)) // 8 * 8
    return int(max(8, min(ct, C)))


# --------------------------------------------------------------------------- #
# Wrapper
# --------------------------------------------------------------------------- #
def drop_block_2d(x, rand_field, *, drop_prob, block_size, training=True):
    """DropBlock2D forward. x: (N, C, H, W); rand_field: (N, H, W) uniform[0,1)."""
    assert x.ndim == 4, "Expected input with 4 dimensions (N, C, H, W)"
    if (not training) or drop_prob == 0.0:
        return x

    N, C, H, W = x.shape
    HW = H * W
    gamma = ((1.0 - drop_prob) * (W * H) / block_size ** 2 /
             ((W - block_size + 1) * (H - block_size + 1)))

    # --- kernel 1: scaled block mask (all samples in one step) ---------------
    mask_scaled = pl.pallas_call(
        functools.partial(_mask_kernel, gamma=gamma, block_size=block_size,
                          N=N, H=H, W=W),
        grid=(1,),
        in_specs=[pl.BlockSpec((N, H, W), lambda i: (0, 0, 0))],
        out_specs=pl.BlockSpec((N, H, W), lambda i: (0, 0, 0)),
        out_shape=jax.ShapeDtypeStruct((N, H, W), x.dtype),
        compiler_params=pltpu.CompilerParams(
            dimension_semantics=("arbitrary",)),
    )(rand_field)

    # (N, H, W) -> (N, 1, H*W): contiguity-preserving, free at the XLA level.
    mask_lanes = mask_scaled.reshape(N, 1, HW)

    # --- kernel 2: lane-dense, channel-tiled apply ----------------------------
    Ct = _pick_channel_tile(C, HW, jnp.dtype(x.dtype).itemsize)
    out = pl.pallas_call(
        _apply_kernel,
        grid=(N, pl.cdiv(C, Ct)),
        in_specs=[pl.BlockSpec((1, Ct, HW), lambda n, c: (n, c, 0)),
                  pl.BlockSpec((1, 1, HW), lambda n, c: (n, 0, 0))],
        out_specs=pl.BlockSpec((1, Ct, HW), lambda n, c: (n, c, 0)),
        out_shape=jax.ShapeDtypeStruct((N, C, HW), x.dtype),
        compiler_params=pltpu.CompilerParams(
            dimension_semantics=("parallel", "parallel"),
            vmem_limit_bytes=32 * 1024 * 1024),
    )(x.reshape(N, C, HW), mask_lanes)
    return out.reshape(N, C, H, W)


# --------------------------------------------------------------------------- #
# Pure-JAX reference (mirrors the PyTorch module, same random field)
# --------------------------------------------------------------------------- #
def _reference(x, rand_field, *, drop_prob, block_size):
    N, C, H, W = x.shape
    gamma = ((1.0 - drop_prob) * (W * H) / block_size ** 2 /
             ((W - block_size + 1) * (H - block_size + 1)))
    half = block_size // 2
    m = (rand_field < gamma).astype(jnp.float32)
    base = jnp.zeros((N, H, W), jnp.float32).at[
        :, half:H - half, half:W - half].set(1.0)
    m = m * base
    pooled = lax.reduce_window(
        m, -jnp.inf, lax.max,
        window_dimensions=(1, block_size, block_size),
        window_strides=(1, 1, 1),
        padding=((0, 0),
                 (half, block_size - 1 - half),
                 (half, block_size - 1 - half)))
    bm = 1.0 - pooled
    out = x * bm[:, None, :, :]
    out = out * bm.size / bm.sum()
    return out


if __name__ == "__main__":
    # TODO(synk): torch.rand's RNG stream is not reproduced; the uniform random
    # field is generated with jax.random and fed to the kernel instead.
    N, C, H, W = 2, 4, 16, 16

    key = jax.random.PRNGKey(0)
    kx, kr = jax.random.split(key)
    x = jax.random.normal(kx, (N, C, H, W), dtype=jnp.float32)
    rand_field = jax.random.uniform(kr, (N, H, W), dtype=jnp.float32)

    # Check both an odd and an even block size (even-bs trim path).
    for drop_prob, block_size in ((0.1, 3), (0.1, 4)):
        out = drop_block_2d(x, rand_field, drop_prob=drop_prob,
                            block_size=block_size, training=True)
        out = jax.block_until_ready(out)
        ref = _reference(x, rand_field, drop_prob=drop_prob,
                         block_size=block_size)
        assert out.shape == x.shape and out.dtype == x.dtype
        assert jnp.allclose(out, ref, atol=1e-5, rtol=1e-5), (
            f"mismatch vs reference (block_size={block_size})")

    print("KERNEL_OK")
</pallas_src>

<mosaic_0001>
module attributes {stable_mosaic.version = 11 : i64} {
  func.func @_mask_kernel(%arg0: i32, %arg1: memref<2x16x16xf32, #tpu.memory_space<vmem>>, %arg2: memref<2x16x16xf32, #tpu.memory_space<vmem>>) attributes {dimension_semantics = [#tpu.dimension_semantics<arbitrary>], iteration_bounds = array<i64: 1>, scalar_prefetch = 0 : i64, scratch_operands = 0 : i64, tpu.core_type = #tpu.core_type<tc>, window_params = [{pipeline_mode = #tpu.pipeline_mode<synchronous>, transform_indices = @transform_0, window_bounds = array<i64: 2, 16, 16>}, {pipeline_mode = #tpu.pipeline_mode<synchronous>, transform_indices = @transform_1, window_bounds = array<i64: 2, 16, 16>}]} {
    %c0 = arith.constant 0 : index
    %c0_0 = arith.constant 0 : index
    %c0_1 = arith.constant 0 : index
    %0 = vector.load %arg1[%c0, %c0_0, %c0_1] : memref<2x16x16xf32, #tpu.memory_space<vmem>>, vector<2x16x16xf32>
    %cst = arith.constant 0.130612239 : f32
    %1 = vector.broadcast %cst : f32 to vector<2x16x16xf32>
    %2 = arith.cmpf olt, %0, %1 : vector<2x16x16xf32>
    %3 = arith.extui %2 : vector<2x16x16xi1> to vector<2x16x16xi32>
    %4 = arith.sitofp %3 : vector<2x16x16xi32> to vector<2x16x16xf32>
    %5 = tpu.iota {dimensions = array<i32: 1>} : vector<2x16x16xi32>
    %6 = tpu.iota {dimensions = array<i32: 2>} : vector<2x16x16xi32>
    %c1_i32 = arith.constant 1 : i32
    %7 = vector.broadcast %c1_i32 : i32 to vector<2x16x16xi32>
    %8 = arith.cmpi sge, %5, %7 : vector<2x16x16xi32>
    %c15_i32 = arith.constant 15 : i32
    %9 = vector.broadcast %c15_i32 : i32 to vector<2x16x16xi32>
    %10 = arith.cmpi slt, %5, %9 : vector<2x16x16xi32>
    %11 = arith.andi %8, %10 : vector<2x16x16xi1>
    %c1_i32_2 = arith.constant 1 : i32
    %12 = vector.broadcast %c1_i32_2 : i32 to vector<2x16x16xi32>
    %13 = arith.cmpi sge, %6, %12 : vector<2x16x16xi32>
    %14 = arith.andi %11, %13 : vector<2x16x16xi1>
    %c15_i32_3 = arith.constant 15 : i32
    %15 = vector.broadcast %c15_i32_3 : i32 to vector<2x16x16xi32>
    %16 = arith.cmpi slt, %6, %15 : vector<2x16x16xi32>
    %17 = arith.andi %14, %16 : vector<2x16x16xi1>
    %cst_4 = arith.constant 0.000000e+00 : f32
    %18 = vector.broadcast %cst_4 : f32 to vector<2x16x16xf32>
    %19 = arith.select %17, %4, %18 : vector<2x16x16xi1>, vector<2x16x16xf32>
    %20 = tpu.iota {dimensions = array<i32: 1>} : vector<2x16x16xi32>
    %21 = tpu.iota {dimensions = array<i32: 2>} : vector<2x16x16xi32>
    %c1_i32_5 = arith.constant 1 : i32
    %22 = vector.broadcast %c1_i32_5 : i32 to vector<2x16x16xi32>
    %23 = arith.subi %20, %22 : vector<2x16x16xi32>
    %24 = arith.cmpi sge, %21, %23 : vector<2x16x16xi32>
    %c1_i32_6 = arith.constant 1 : i32
    %25 = vector.broadcast %c1_i32_6 : i32 to vector<2x16x16xi32>
    %26 = arith.addi %20, %25 : vector<2x16x16xi32>
    %27 = arith.cmpi sle, %21, %26 : vector<2x16x16xi32>
    %28 = arith.andi %24, %27 : vector<2x16x16xi1>
    %29 = arith.extui %28 : vector<2x16x16xi1> to vector<2x16x16xi32>
    %30 = arith.sitofp %29 : vector<2x16x16xi32> to vector<2x16x16xf32>
    %31 = tpu.iota {dimensions = array<i32: 1>} : vector<2x16x16xi32>
    %32 = tpu.iota {dimensions = array<i32: 2>} : vector<2x16x16xi32>
    %c1_i32_7 = arith.constant 1 : i32
    %33 = vector.broadcast %c1_i32_7 : i32 to vector<2x16x16xi32>
    %34 = arith.subi %32, %33 : vector<2x16x16xi32>
    %35 = arith.cmpi sge, %31, %34 : vector<2x16x16xi32>
    %c1_i32_8 = arith.constant 1 : i32
    %36 = vector.broadcast %c1_i32_8 : i32 to vector<2x16x16xi32>
    %37 = arith.addi %32, %36 : vector<2x16x16xi32>
    %38 = arith.cmpi sle, %31, %37 : vector<2x16x16xi32>
    %39 = arith.andi %35, %38 : vector<2x16x16xi1>
    %40 = arith.extui %39 : vector<2x16x16xi1> to vector<2x16x16xi32>
    %41 = arith.sitofp %40 : vector<2x16x16xi32> to vector<2x16x16xf32>
    "tpu.trace_start"() <{level = 10 : i32, message = "nrc,ncj->nrj"}> : () -> ()
    %cst_9 = arith.constant dense<0.000000e+00> : vector<2x16x16xf32>
    %42 = tpu.matmul %19, %41, %cst_9 {dimension_numbers = #tpu.dot_dimension_numbers<[2], [1], [1], [2], [0, 0, 0, 1, 1, 2], [0], [0]>} : vector<2x16x16xf32>, vector<2x16x16xf32>, vector<2x16x16xf32> -> vector<2x16x16xf32>
    "tpu.trace_stop"() : () -> ()
    "tpu.trace_start"() <{level = 10 : i32, message = "nir,nrj->nij"}> : () -> ()
    %cst_10 = arith.constant dense<0.000000e+00> : vector<2x16x16xf32>
    %43 = tpu.matmul %30, %42, %cst_10 {dimension_numbers = #tpu.dot_dimension_numbers<[2], [1], [1], [2], [0, 0, 0, 1, 1, 2], [0], [0]>} : vector<2x16x16xf32>, vector<2x16x16xf32>, vector<2x16x16xf32> -> vector<2x16x16xf32>
    %cst_11 = arith.constant 5.000000e-01 : f32
    "tpu.trace_stop"() : () -> ()
    %44 = vector.broadcast %cst_11 : f32 to vector<2x16x16xf32>
    %45 = arith.cmpf ogt, %43, %44 : vector<2x16x16xf32>
    %cst_12 = arith.constant 0.000000e+00 : f32
    %cst_13 = arith.constant 1.000000e+00 : f32
    %46 = vector.broadcast %cst_12 : f32 to vector<2x16x16xf32>
    %47 = vector.broadcast %cst_13 : f32 to vector<2x16x16xf32>
    %48 = arith.select %45, %46, %47 : vector<2x16x16xi1>, vector<2x16x16xf32>
    %49 = vector.shape_cast %48 : vector<2x16x16xf32> to vector<1x2x16x16xf32>
    %cst_14 = arith.constant dense<0.000000e+00> : vector<1xf32>
    %50 = vector.multi_reduction <add>, %49, %cst_14 [1, 2, 3] : vector<1x2x16x16xf32> to vector<1xf32>
    %51 = vector.shape_cast %50 : vector<1xf32> to vector<1x1x1x1xf32>
    %52 = vector.extract %51[0, 0, 0, 0] : f32 from vector<1x1x1x1xf32>
    %cst_15 = arith.constant 1.000000e+00 : f32
    %53 = arith.maximumf %52, %cst_15 : f32
    %cst_16 = arith.constant 5.120000e+02 : f32
    %54 = arith.divf %cst_16, %53 : f32
    %55 = vector.broadcast %54 : f32 to vector<2x16x16xf32>
    %56 = arith.mulf %48, %55 : vector<2x16x16xf32>
    %c0_17 = arith.constant 0 : index
    %c0_18 = arith.constant 0 : index
    %c0_19 = arith.constant 0 : index
    %57 = vector.load %arg2[%c0_17, %c0_18, %c0_19] : memref<2x16x16xf32, #tpu.memory_space<vmem>>, vector<2x16x16xf32>
    tpu.vector_store %arg2[%c0_17, %c0_18, %c0_19], %56 {strides = array<i32>} : memref<2x16x16xf32, #tpu.memory_space<vmem>>, vector<2x16x16xf32>,
    return
  }
  func.func @transform_0(%arg0: i32) -> (i32, i32, i32) {
    %c0_i32 = arith.constant 0 : i32
    %c0_i32_0 = arith.constant 0 : i32
    %c0_i32_1 = arith.constant 0 : i32
    %c0_i32_2 = arith.constant 0 : i32
    return %c0_i32, %c0_i32_0, %c0_i32_1 : i32, i32, i32
  }
  func.func @transform_1(%arg0: i32) -> (i32, i32, i32) {
    %c0_i32 = arith.constant 0 : i32
    %c0_i32_0 = arith.constant 0 : i32
    %c0_i32_1 = arith.constant 0 : i32
    %c0_i32_2 = arith.constant 0 : i32
    return %c0_i32, %c0_i32_0, %c0_i32_1 : i32, i32, i32
  }
}

</mosaic_0001>

<llo_original>
// kernel: tpu_custom_call.1
$region0: #{tpu_custom_call.1}
  #allocation0 [shape = 'u32[]', space=smem, size = 0x4, offset = 0x4, fixed_abs, tag = 'smem constant byte address 0x4 - core index']
  #allocation1 [shape = 'u32[144,128]{1,0:T(1,128)}', space=vmem, size = 0x12000, scoped, tag = 'internal scratch']
  %s0 = inlined_call_operand.hbm [shape: f32[2,16,16], index: 0, kind: input, shape index: {}]
  %s1 = inlined_call_operand.hbm [shape: f32[2,16,16], index: 1, kind: output, shape index: {}]
  %s2 = sld [smem:[#allocation0]]
  $region18: #{tpu_custom_call.1} parent=0
    _
  %s4 = ssub.s32 1, %s2
  %s5 = scalar_select 0, %s4, %s2
  $region1: #{tpu_custom_call.1} parent=0
    #allocation2 [shape = 'u8[16384]{0}', space=vmem, size = 0x4000, scoped, tag = 'input window, operand 0, single buffered']
    #allocation3 [shape = 's32[1]{0}', space=sflag, size = 0x4, scoped, tag = 'scoped memory for tpu_custom_call.1']
    #allocation4 [shape = 's32[1]{0}', space=sflag, size = 0x4, scoped, tag = 'scoped memory for tpu_custom_call.1']
    #allocation5 [shape = 'u8[16384]{0}', space=vmem, size = 0x4000, scoped, tag = 'output window, operand 0, single buffered']
    %6 = vsyncpa [#allocation3], 0
    %7 = vsyncpa [#allocation4], 0
    // Predicated region
    $region2: #{tpu_custom_call.1} parent=1 // pred_check
      _
    $region3: #{tpu_custom_call.1} parent=1 // pred_check_branch
      %9 = sbr.rel (0) target = $region5
    $region4: #{tpu_custom_call.1} parent=1 // pred_region
      %s11 = ssub.s32 512, 512
      %12 = vsyncadd [#allocation3], %s11
      %s13 = sshll.u32 [#allocation2], 4
      %s14 = int_to_ptr.vmem [resolvable:$true] %s13
      %19 = dma.hbm_to_vmem [thread:$0]  %s0, 512, %s14, [#allocation3], 128, 128, 8
    $region5: #{tpu_custom_call.1} parent=1 // pred_fallthru
      _
    // Predicated region
    $region6: #{tpu_custom_call.1} parent=1 // pred_check
      _
    $region7: #{tpu_custom_call.1} parent=1 // pred_check_branch
      %21 = sbr.rel (0) target = $region9
    $region8: #{tpu_custom_call.1} parent=1 // pred_region
      %22 = dma.done [#allocation3], 512
    $region9: #{tpu_custom_call.1} parent=1 // pred_fallthru
      _
    %v23 = vld [vmem:[#allocation2] sm:$0xff]
    %v24 = vld [vmem:[#allocation2 + $0x8] sm:$0xff]
    %v25 = vld [vmem:[#allocation2 + $0x10] sm:$0xff]
    %v26 = vld [vmem:[#allocation2 + $0x18] sm:$0xff]
    %vm27 = vcmp.lt.f32.partialorder %v23, 0.13061224
    %vm28 = vcmp.lt.f32.partialorder %v24, 0.13061224
    %vm29 = vcmp.lt.f32.partialorder %v25, 0.13061224
    %vm30 = vcmp.lt.f32.partialorder %v26, 0.13061224
    %v31 = vsel %vm27, 1, 0
    %v32 = vsel %vm28, 1, 0
    %v33 = vsel %vm29, 1, 0
    %v34 = vsel %vm30, 1, 0
    %v35 = vcvt.s32.f32 %v31
    %v36 = vcvt.s32.f32 %v32
    %v37 = vcvt.s32.f32 %v33
    %v38 = vcvt.s32.f32 %v34
    %v39 = vlaneseq
    %v40 = vshrl.u32 %v39, 7
    %v41 = vadd.s32 %v40, 8
    %v42 = vlaneseq
    %v43 = vand.u32 %v42, 127
    %vm44 = vcmp.ge.s32.totalorder %v40, 1
    %vm45 = vcmp.ge.s32.totalorder %v41, 1
    %vm46 = vcmp.lt.s32.totalorder %v40, 15
    %vm47 = vcmp.lt.s32.totalorder %v41, 15
    %vm48 = vmand %vm44, %vm46
    %vm49 = vmand %vm45, %vm47
    %vm50 = vcmp.ge.s32.totalorder %v43, 1
    %vm51 = vmand %vm48, %vm50
    %vm52 = vmand %vm49, %vm50
    %vm53 = vcmp.lt.s32.totalorder %v43, 15
    %vm54 = vmand %vm51, %vm53
    %vm55 = vmand %vm52, %vm53
    %v56 = vsel %vm54, %v35, 0.0
    %v57 = vsel %vm55, %v36, 0.0
    %v58 = vsel %vm54, %v37, 0.0
    %v59 = vsel %vm55, %v38, 0.0
    %v60 = vsub.s32 %v40, 1
    %v61 = vsub.s32 %v41, 1
    %vm62 = vcmp.ge.s32.totalorder %v43, %v60
    %vm63 = vcmp.ge.s32.totalorder %v43, %v61
    %v64 = vadd.s32 %v40, 1
    %v65 = vadd.s32 %v41, 1
    %vm66 = vcmp.le.s32.totalorder %v43, %v64
    %vm67 = vcmp.le.s32.totalorder %v43, %v65
    %vm68 = vmand %vm62, %vm66
    %vm69 = vmand %vm63, %vm67
    %v70 = vsel %vm68, 1, 0
    %v71 = vsel %vm69, 1, 0
    %v72 = vcvt.s32.f32 %v70
    %v73 = vcvt.s32.f32 %v71
    %v74 = vsub.s32 %v43, 1
    %vm75 = vcmp.ge.s32.totalorder %v40, %v74
    %vm76 = vcmp.ge.s32.totalorder %v41, %v74
    %v77 = vadd.s32 %v43, 1
    %vm78 = vcmp.le.s32.totalorder %v40, %v77
    %vm79 = vcmp.le.s32.totalorder %v41, %v77
    %vm80 = vmand %vm75, %vm78
    %vm81 = vmand %vm76, %vm79
    %v82 = vsel %vm80, 1, 0
    %v83 = vsel %vm81, 1, 0
    %v84 = vcvt.s32.f32 %v82
    %v85 = vcvt.s32.f32 %v83
    %vm86 = vcmask 130048
    %v88 = vsel %vm86, %v56, 0
    %v91 = vsel %vm86, %v57, 0
    %93 = vmatprep.subr.mxu0 0.0
    %94 = vmatpush1.msra.mxu0 %v84
    %95 = vmatprep.subr.mxu0 0.0
    %96 = vmatpush1.msra.mxu0 %v85
    %97 = vmatprep.subr.mxu0 0.0
    %98 = vmatpush1.msra.mxu0 0.0
    %99 = vmatprep.subr.mxu0 0.0
    %100 = vmatpush1.msra.mxu0 0.0
    %101 = vmatprep.subr.mxu0 0.0
    %102 = vmatpush1.msra.mxu0 0.0
    %103 = vmatprep.subr.mxu0 0.0
    %104 = vmatpush1.msra.mxu0 0.0
    %105 = vmatprep.subr.mxu0 0.0
    %106 = vmatpush1.msra.mxu0 0.0
    %107 = vmatprep.subr.mxu0 0.0
    %108 = vmatpush1.msra.mxu0 0.0
    %109 = vmatprep.subr.mxu0 0.0
    %110 = vmatpush1.msra.mxu0 0.0
    %111 = vmatprep.subr.mxu0 0.0
    %112 = vmatpush1.msra.mxu0 0.0
    %113 = vmatprep.subr.mxu0 0.0
    %114 = vmatpush1.msra.mxu0 0.0
    %115 = vmatprep.subr.mxu0 0.0
    %116 = vmatpush1.msra.mxu0 0.0
    %117 = vmatprep.subr.mxu0 0.0
    %118 = vmatpush1.msra.mxu0 0.0
    %119 = vmatprep.subr.mxu0 0.0
    %120 = vmatpush1.msra.mxu0 0.0
    %121 = vmatprep.subr.mxu0 0.0
    %122 = vmatpush1.msra.mxu0 0.0
    %123 = vmatprep.subr.mxu0 0.0
    %124 = vmatpush1.msra.mxu0 0.0
    %125 = vmatprep.subr.mxu0 0.0
    %126 = vmatpush1.msra.mxu0 0.0
    %127 = vmatprep.subr.mxu0 0.0
    %128 = vmatpush1.msra.mxu0 0.0
    %129 = vmatprep.subr.mxu0 0.0
    %130 = vmatpush1.msra.mxu0 0.0
    %131 = vmatprep.subr.mxu0 0.0
    %132 = vmatpush1.msra.mxu0 0.0
    %133 = vmatprep.subr.mxu0 0.0
    %134 = vmatpush1.msra.mxu0 0.0
    %135 = vmatprep.subr.mxu0 0.0
    %136 = vmatpush1.msra.mxu0 0.0
    %137 = vmatprep.subr.mxu0 0.0
    %138 = vmatpush1.msra.mxu0 0.0
    %139 = vmatprep.subr.mxu0 0.0
    %140 = vmatpush1.msra.mxu0 0.0
    %141 = vmatprep.subr.mxu0 0.0
    %142 = vmatpush1.msra.mxu0 0.0
    %143 = vmatprep.subr.mxu0 0.0
    %144 = vmatpush1.msra.mxu0 0.0
    %145 = vmatprep.subr.mxu0 0.0
    %146 = vmatpush1.msra.mxu0 0.0
    %147 = vmatprep.subr.mxu0 0.0
    %148 = vmatpush1.msra.mxu0 0.0
    %149 = vmatprep.subr.mxu0 0.0
    %150 = vmatpush1.msra.mxu0 0.0
    %151 = vmatprep.subr.mxu0 0.0
    %152 = vmatpush1.msra.mxu0 0.0
    %153 = vmatprep.subr.mxu0 0.0
    %154 = vmatpush1.msra.mxu0 0.0
    %155 = vmatprep.subr.mxu0 0.0
    %156 = vmatpush1.msra.mxu0 0.0
    %157 = vmatprep.mubr.f32.mxu0 0.0
    %158 = vmatmul.mubr.f32.gmra.mrb[0].mxu0 %v88
    %v159 = vpop.f32.mrb[0].mxu0
    %v160 = vadd.f32 0.0, %v159
    %v161 = vpop.f32.mrb[0].mxu0
    %162 = vmatprep.mubr.f32.mxu0 0.0
    %163 = vmatmul.mubr.f32.gmra.mrb[0].mxu0 %v91
    %v164 = vpop.f32.mrb[0].mxu0
    %v165 = vadd.f32 0.0, %v164
    %v166 = vpop.f32.mrb[0].mxu0
    %167 = vdwg.mxu0
    %v169 = vsel %vm86, %v58, 0
    %v172 = vsel %vm86, %v59, 0
    %174 = vmatprep.subr.mxu0 0.0
    %175 = vmatpush1.msra.mxu0 %v84
    %176 = vmatprep.subr.mxu0 0.0
    %177 = vmatpush1.msra.mxu0 %v85
    %178 = vmatprep.subr.mxu0 0.0
    %179 = vmatpush1.msra.mxu0 0.0
    %180 = vmatprep.subr.mxu0 0.0
    %181 = vmatpush1.msra.mxu0 0.0
    %182 = vmatprep.subr.mxu0 0.0
    %183 = vmatpush1.msra.mxu0 0.0
    %184 = vmatprep.subr.mxu0 0.0
    %185 = vmatpush1.msra.mxu0 0.0
    %186 = vmatprep.subr.mxu0 0.0
    %187 = vmatpush1.msra.mxu0 0.0
    %188 = vmatprep.subr.mxu0 0.0
    %189 = vmatpush1.msra.mxu0 0.0
    %190 = vmatprep.subr.mxu0 0.0
    %191 = vmatpush1.msra.mxu0 0.0
    %192 = vmatprep.subr.mxu0 0.0
    %193 = vmatpush1.msra.mxu0 0.0
    %194 = vmatprep.subr.mxu0 0.0
    %195 = vmatpush1.msra.mxu0 0.0
    %196 = vmatprep.subr.mxu0 0.0
    %197 = vmatpush1.msra.mxu0 0.0
    %198 = vmatprep.subr.mxu0 0.0
    %199 = vmatpush1.msra.mxu0 0.0
    %200 = vmatprep.subr.mxu0 0.0
    %201 = vmatpush1.msra.mxu0 0.0
    %202 = vmatprep.subr.mxu0 0.0
    %203 = vmatpush1.msra.mxu0 0.0
    %204 = vmatprep.subr.mxu0 0.0
    %205 = vmatpush1.msra.mxu0 0.0
    %206 = vmatprep.subr.mxu0 0.0
    %207 = vmatpush1.msra.mxu0 0.0
    %208 = vmatprep.subr.mxu0 0.0
    %209 = vmatpush1.msra.mxu0 0.0
    %210 = vmatprep.subr.mxu0 0.0
    %211 = vmatpush1.msra.mxu0 0.0
    %212 = vmatprep.subr.mxu0 0.0
    %213 = vmatpush1.msra.mxu0 0.0
    %214 = vmatprep.subr.mxu0 0.0
    %215 = vmatpush1.msra.mxu0 0.0
    %216 = vmatprep.subr.mxu0 0.0
    %217 = vmatpush1.msra.mxu0 0.0
    %218 = vmatprep.subr.mxu0 0.0
    %219 = vmatpush1.msra.mxu0 0.0
    %220 = vmatprep.subr.mxu0 0.0
    %221 = vmatpush1.msra.mxu0 0.0
    %222 = vmatprep.subr.mxu0 0.0
    %223 = vmatpush1.msra.mxu0 0.0
    %224 = vmatprep.subr.mxu0 0.0
    %225 = vmatpush1.msra.mxu0 0.0
    %226 = vmatprep.subr.mxu0 0.0
    %227 = vmatpush1.msra.mxu0 0.0
    %228 = vmatprep.subr.mxu0 0.0
    %229 = vmatpush1.msra.mxu0 0.0
    %230 = vmatprep.subr.mxu0 0.0
    %231 = vmatpush1.msra.mxu0 0.0
    %232 = vmatprep.subr.mxu0 0.0
    %233 = vmatpush1.msra.mxu0 0.0
    %234 = vmatprep.subr.mxu0 0.0
    %235 = vmatpush1.msra.mxu0 0.0
    %236 = vmatprep.subr.mxu0 0.0
    %237 = vmatpush1.msra.mxu0 0.0
    %238 = vmatprep.mubr.f32.mxu0 0.0
    %239 = vmatmul.mubr.f32.gmra.mrb[0].mxu0 %v169
    %v240 = vpop.f32.mrb[0].mxu0
    %v241 = vadd.f32 0.0, %v240
    %v242 = vpop.f32.mrb[0].mxu0
    %243 = vmatprep.mubr.f32.mxu0 0.0
    %244 = vmatmul.mubr.f32.gmra.mrb[0].mxu0 %v172
    %v245 = vpop.f32.mrb[0].mxu0
    %v246 = vadd.f32 0.0, %v245
    %v247 = vpop.f32.mrb[0].mxu0
    %248 = vdwg.mxu0
    %v250 = vsel %vm86, %v72, 0
    %v253 = vsel %vm86, %v73, 0
    %255 = vmatprep.subr.mxu0 0.0
    %256 = vmatpush1.msra.mxu0 %v160
    %257 = vmatprep.subr.mxu0 0.0
    %258 = vmatpush1.msra.mxu0 %v165
    %259 = vmatprep.subr.mxu0 0.0
    %260 = vmatpush1.msra.mxu0 0.0
    %261 = vmatprep.subr.mxu0 0.0
    %262 = vmatpush1.msra.mxu0 0.0
    %263 = vmatprep.subr.mxu0 0.0
    %264 = vmatpush1.msra.mxu0 0.0
    %265 = vmatprep.subr.mxu0 0.0
    %266 = vmatpush1.msra.mxu0 0.0
    %267 = vmatprep.subr.mxu0 0.0
    %268 = vmatpush1.msra.mxu0 0.0
    %269 = vmatprep.subr.mxu0 0.0
    %270 = vmatpush1.msra.mxu0 0.0
    %271 = vmatprep.subr.mxu0 0.0
    %272 = vmatpush1.msra.mxu0 0.0
    %273 = vmatprep.subr.mxu0 0.0
    %274 = vmatpush1.msra.mxu0 0.0
    %275 = vmatprep.subr.mxu0 0.0
    %276 = vmatpush1.msra.mxu0 0.0
    %277 = vmatprep.subr.mxu0 0.0
    %278 = vmatpush1.msra.mxu0 0.0
    %279 = vmatprep.subr.mxu0 0.0
    %280 = vmatpush1.msra.mxu0 0.0
    %281 = vmatprep.subr.mxu0 0.0
    %282 = vmatpush1.msra.mxu0 0.0
    %283 = vmatprep.subr.mxu0 0.0
    %284 = vmatpush1.msra.mxu0 0.0
    %285 = vmatprep.subr.mxu0 0.0
    %286 = vmatpush1.msra.mxu0 0.0
    %287 = vmatprep.subr.mxu0 0.0
    %288 = vmatpush1.msra.mxu0 0.0
    %289 = vmatprep.subr.mxu0 0.0
    %290 = vmatpush1.msra.mxu0 0.0
    %291 = vmatprep.subr.mxu0 0.0
    %292 = vmatpush1.msra.mxu0 0.0
    %293 = vmatprep.subr.mxu0 0.0
    %294 = vmatpush1.msra.mxu0 0.0
    %295 = vmatprep.subr.mxu0 0.0
    %296 = vmatpush1.msra.mxu0 0.0
    %297 = vmatprep.subr.mxu0 0.0
    %298 = vmatpush1.msra.mxu0 0.0
    %299 = vmatprep.subr.mxu0 0.0
    %300 = vmatpush1.msra.mxu0 0.0
    %301 = vmatprep.subr.mxu0 0.0
    %302 = vmatpush1.msra.mxu0 0.0
    %303 = vmatprep.subr.mxu0 0.0
    %304 = vmatpush1.msra.mxu0 0.0
    %305 = vmatprep.subr.mxu0 0.0
    %306 = vmatpush1.msra.mxu0 0.0
    %307 = vmatprep.subr.mxu0 0.0
    %308 = vmatpush1.msra.mxu0 0.0
    %309 = vmatprep.subr.mxu0 0.0
    %310 = vmatpush1.msra.mxu0 0.0
    %311 = vmatprep.subr.mxu0 0.0
    %312 = vmatpush1.msra.mxu0 0.0
    %313 = vmatprep.subr.mxu0 0.0
    %314 = vmatpush1.msra.mxu0 0.0
    %315 = vmatprep.subr.mxu0 0.0
    %316 = vmatpush1.msra.mxu0 0.0
    %317 = vmatprep.subr.mxu0 0.0
    %318 = vmatpush1.msra.mxu0 0.0
    %319 = vmatprep.mubr.f32.mxu0 0.0
    %320 = vmatmul.mubr.f32.gmra.mrb[0].mxu0 %v250
    %v321 = vpop.f32.mrb[0].mxu0
    %v322 = vadd.f32 0.0, %v321
    %v323 = vpop.f32.mrb[0].mxu0
    %324 = vmatprep.mubr.f32.mxu0 0.0
    %325 = vmatmul.mubr.f32.gmra.mrb[0].mxu0 %v253
    %v326 = vpop.f32.mrb[0].mxu0
    %v327 = vadd.f32 0.0, %v326
    %v328 = vpop.f32.mrb[0].mxu0
    %329 = vdwg.mxu0
    %330 = vmatprep.subr.mxu0 0.0
    %331 = vmatpush1.msra.mxu0 %v241
    %332 = vmatprep.subr.mxu0 0.0
    %333 = vmatpush1.msra.mxu0 %v246
    %334 = vmatprep.subr.mxu0 0.0
    %335 = vmatpush1.msra.mxu0 0.0
    %336 = vmatprep.subr.mxu0 0.0
    %337 = vmatpush1.msra.mxu0 0.0
    %338 = vmatprep.subr.mxu0 0.0
    %339 = vmatpush1.msra.mxu0 0.0
    %340 = vmatprep.subr.mxu0 0.0
    %341 = vmatpush1.msra.mxu0 0.0
    %342 = vmatprep.subr.mxu0 0.0
    %343 = vmatpush1.msra.mxu0 0.0
    %344 = vmatprep.subr.mxu0 0.0
    %345 = vmatpush1.msra.mxu0 0.0
    %346 = vmatprep.subr.mxu0 0.0
    %347 = vmatpush1.msra.mxu0 0.0
    %348 = vmatprep.subr.mxu0 0.0
    %349 = vmatpush1.msra.mxu0 0.0
    %350 = vmatprep.subr.mxu0 0.0
    %351 = vmatpush1.msra.mxu0 0.0
    %352 = vmatprep.subr.mxu0 0.0
    %353 = vmatpush1.msra.mxu0 0.0
    %354 = vmatprep.subr.mxu0 0.0
    %355 = vmatpush1.msra.mxu0 0.0
    %356 = vmatprep.subr.mxu0 0.0
    %357 = vmatpush1.msra.mxu0 0.0
    %358 = vmatprep.subr.mxu0 0.0
    %359 = vmatpush1.msra.mxu0 0.0
    %360 = vmatprep.subr.mxu0 0.0
    %361 = vmatpush1.msra.mxu0 0.0
    %362 = vmatprep.subr.mxu0 0.0
    %363 = vmatpush1.msra.mxu0 0.0
    %364 = vmatprep.subr.mxu0 0.0
    %365 = vmatpush1.msra.mxu0 0.0
    %366 = vmatprep.subr.mxu0 0.0
    %367 = vmatpush1.msra.mxu0 0.0
    %368 = vmatprep.subr.mxu0 0.0
    %369 = vmatpush1.msra.mxu0 0.0
    %370 = vmatprep.subr.mxu0 0.0
    %371 = vmatpush1.msra.mxu0 0.0
    %372 = vmatprep.subr.mxu0 0.0
    %373 = vmatpush1.msra.mxu0 0.0
    %374 = vmatprep.subr.mxu0 0.0
    %375 = vmatpush1.msra.mxu0 0.0
    %376 = vmatprep.subr.mxu0 0.0
    %377 = vmatpush1.msra.mxu0 0.0
    %378 = vmatprep.subr.mxu0 0.0
    %379 = vmatpush1.msra.mxu0 0.0
    %380 = vmatprep.subr.mxu0 0.0
    %381 = vmatpush1.msra.mxu0 0.0
    %382 = vmatprep.subr.mxu0 0.0
    %383 = vmatpush1.msra.mxu0 0.0
    %384 = vmatprep.subr.mxu0 0.0
    %385 = vmatpush1.msra.mxu0 0.0
    %386 = vmatprep.subr.mxu0 0.0
    %387 = vmatpush1.msra.mxu0 0.0
    %388 = vmatprep.subr.mxu0 0.0
    %389 = vmatpush1.msra.mxu0 0.0
    %390 = vmatprep.subr.mxu0 0.0
    %391 = vmatpush1.msra.mxu0 0.0
    %392 = vmatprep.subr.mxu0 0.0
    %393 = vmatpush1.msra.mxu0 0.0
    %394 = vmatprep.mubr.f32.mxu0 0.0
    %395 = vmatmul.mubr.f32.gmra.mrb[0].mxu0 %v250
    %v396 = vpop.f32.mrb[0].mxu0
    %v397 = vadd.f32 0.0, %v396
    %v398 = vpop.f32.mrb[0].mxu0
    %399 = vmatprep.mubr.f32.mxu0 0.0
    %400 = vmatmul.mubr.f32.gmra.mrb[0].mxu0 %v253
    %v401 = vpop.f32.mrb[0].mxu0
    %v402 = vadd.f32 0.0, %v401
    %v403 = vpop.f32.mrb[0].mxu0
    %404 = vdwg.mxu0
    %vm405 = vcmp.gt.f32.partialorder %v322, 0.5
    %vm406 = vcmp.gt.f32.partialorder %v327, 0.5
    %vm407 = vcmp.gt.f32.partialorder %v397, 0.5
    %vm408 = vcmp.gt.f32.partialorder %v402, 0.5
    %v409 = vsel %vm405, 0.0, 1.0
    %v410 = vsel %vm406, 0.0, 1.0
    %v411 = vsel %vm407, 0.0, 1.0
    %v412 = vsel %vm408, 0.0, 1.0
    %v413 = vsel %vm86, %v409, 0.0
    %v414 = vsel %vm86, %v410, 0.0
    %v415 = vadd.f32 %v413, %v414
    %v416 = vsel %vm86, %v411, 0.0
    %v417 = vadd.f32 %v415, %v416
    %v418 = vsel %vm86, %v412, 0.0
    %v419 = vadd.f32 %v417, %v418
    %420 = vadd.xlane.f32.xlu0 %v419
    %v421 = vpop.xlane.xlu0 %420
    %v422 = vrot.slane %v421, 4
    %v423 = vadd.f32 %v421, %v422
    %v424 = vrot.slane %v423, 2
    %v425 = vadd.f32 %v423, %v424
    %v426 = vrot.slane %v425, 1
    %v427 = vadd.f32 %v425, %v426
    %s428 = vtos %v427
    %s429 = smax.f32 %s428, 1.0
    %v430 = vstv %s429
    %v431 = vrcp.pop %v430
    %s432 = vtos %v431
    %s433 = smul.f32 512.0, %s432
    %v434 = vstv %s433
    %v435 = vmul.f32 %v409, %v434
    %v436 = vmul.f32 %v410, %v434
    %v437 = vmul.f32 %v411, %v434
    %v438 = vmul.f32 %v412, %v434
    %439 = vst.msk [vmem:[#allocation5] sm:$0xff] %vm86, %v435
    %440 = vst.msk [vmem:[#allocation5 + $0x8] sm:$0xff] %vm86, %v436
    %441 = vst.msk [vmem:[#allocation5 + $0x10] sm:$0xff] %vm86, %v437
    %442 = vst.msk [vmem:[#allocation5 + $0x18] sm:$0xff] %vm86, %v438
    // Predicated region
    $region10: #{tpu_custom_call.1} parent=1 // pred_check
      _
    $region11: #{tpu_custom_call.1} parent=1 // pred_check_branch
      %444 = sbr.rel (0) target = $region13
    $region12: #{tpu_custom_call.1} parent=1 // pred_region
      %s446 = ssub.s32 512, 512
      %447 = vsyncadd [#allocation4], %s446
      %s448 = sshll.u32 [#allocation5], 4
      %s449 = int_to_ptr.vmem [resolvable:$true] %s448
      %454 = dma.vmem_to_hbm [thread:$0]  %s449, 512, %s1, [#allocation4], 128, 128, 8
    $region13: #{tpu_custom_call.1} parent=1 // pred_fallthru
      _
    // Predicated region
    $region14: #{tpu_custom_call.1} parent=1 // pred_check
      _
    $region15: #{tpu_custom_call.1} parent=1 // pred_check_branch
      %456 = sbr.rel (0) target = $region17
    $region16: #{tpu_custom_call.1} parent=1 // pred_region
      %457 = dma.done [#allocation4], 512
    $region17: #{tpu_custom_call.1} parent=1 // pred_fallthru
      _
    %458 = vsyncpa [#allocation3], 1
    %459 = vsyncpa [#allocation4], 1

</llo_original>
